<compile_context>
chip_gen: v6e
topology: v6e:2x2x1
jax: 0.10.0
libtpu: 0.0.40
codegen_flags: <defaults>
</compile_context>

<pallas_src>
import jax
import jax.numpy as jnp
from jax import lax
from jax.experimental import pallas as pl
from jax.experimental.pallas import tpu as pltpu


# ----------------------------- Pallas kernel --------------------------------
def _conv_mm_relu_kernel(w_ref, p_ref, o_ref):
    # w_ref : (Co, K+1)      conv weight with bias appended as the last column
    # p_ref : (K+1, TILE_M)  im2col patches (transposed, lane-dense along M)
    #                        with a trailing ones-row matching the bias column
    # o_ref : (Co, TILE_M)   conv output tile (lane-dense), ReLU applied
    acc = jnp.dot(w_ref[...], p_ref[...], preferred_element_type=jnp.float32)
    o_ref[...] = jnp.maximum(acc, 0.0).astype(o_ref.dtype)


def _pick_tile_m(m):
    # Lane-dense tiles (multiples of 128). Prefer at least 2 tiles so both
    # v7x TensorCores get work; cap the tile so double-buffered VMEM use stays
    # tiny (28 * 2048 * 4B * 2 buffers ~= 0.45 MiB << 64 MiB v7x VMEM).
    for t in (2048, 1024, 512, 256):
        if m >= 2 * t:
            return t
    return 128


def _conv_relu_pallas(w_aug, patches_t, tile_m):
    co, k1 = w_aug.shape
    _, mp = patches_t.shape
    grid = (mp // tile_m,)
    return pl.pallas_call(
        _conv_mm_relu_kernel,
        out_shape=jax.ShapeDtypeStruct((co, mp), jnp.float32),
        grid_spec=pltpu.PrefetchScalarGridSpec(
            num_scalar_prefetch=0,
            grid=grid,
            in_specs=[
                # Tiny weight block, resident across the grid.
                pl.BlockSpec((co, k1), lambda i: (0, 0)),
                # Lane-dense patch tiles along M.
                pl.BlockSpec((k1, tile_m), lambda i: (0, i)),
            ],
            out_specs=pl.BlockSpec((co, tile_m), lambda i: (0, i)),
        ),
        compiler_params=pltpu.CompilerParams(
            dimension_semantics=("parallel",),
        ),
    )(w_aug, patches_t)


# ------------------------------ Model wrapper --------------------------------
class ModelPallas:
    """Conv2d(3,3,3,padding=1) + ReLU + four bool buffers; conv hot path in Pallas."""

    def __init__(self, key):
        cin, cout, kh, kw = 3, 3, 3, 3
        fan_in = cin * kh * kw
        bound = 1.0 / jnp.sqrt(fan_in)
        k_w, k_b = jax.random.split(key)
        # Deterministic init mimicking torch's default uniform(-1/sqrt(fan_in), +)
        self.weight = jax.random.uniform(
            k_w, (cout, cin, kh, kw), jnp.float32, -bound, bound
        )
        self.bias = jax.random.uniform(k_b, (cout,), jnp.float32, -bound, bound)
        # persistent buffers
        self.applied_bn_folding = jnp.asarray(False)
        self.applied_cle = jnp.asarray(False)
        self.applied_adaround = jnp.asarray(False)
        self.applied_amp = jnp.asarray(False)

    def __call__(self, x_nchw):
        n, cin, h, w = x_nchw.shape
        cout, _, kh, kw = self.weight.shape
        k = cin * kh * kw
        m = n * h * w

        # Spatial zero-pad only (no layout transpose of the input needed).
        xp = jnp.pad(x_nchw, ((0, 0), (0, 0), (1, 1), (1, 1)))

        # im2col built directly in the transposed (K, M) lane-dense layout.
        # K index order = (ci, dh, dw) so it matches weight.reshape(Co, K).
        # A trailing ones-row folds the bias into the matmul.
        taps = [
            xp[:, ci, dh:dh + h, dw:dw + w]
            for ci in range(cin)
            for dh in range(kh)
            for dw in range(kw)
        ]
        taps.append(jnp.ones((n, h, w), xp.dtype))
        patches_t = jnp.stack(taps, axis=0).reshape(k + 1, m)   # (K+1, M)

        # weight (Co,Cin,kh,kw) -> (Co, K); append bias as last column.
        w_aug = jnp.concatenate(
            [self.weight.reshape(cout, k), self.bias[:, None]], axis=1
        )                                                        # (Co, K+1)

        # Tile M (pad to a multiple of the tile so every tile is full width).
        tile_m = _pick_tile_m(m)
        mp = int(pl.cdiv(m, tile_m)) * tile_m
        if mp != m:
            patches_t = jnp.pad(patches_t, ((0, 0), (0, mp - m)))

        out_t = _conv_relu_pallas(w_aug, patches_t, tile_m)      # (Co, Mp)

        # (Co, M) -> (Co, N, H, W) -> (N, Co, H, W): contiguous-slab shuffle.
        out_nchw = out_t[:, :m].reshape(cout, n, h, w).transpose(1, 0, 2, 3)

        return (
            out_nchw,
            self.applied_bn_folding,
            self.applied_cle,
            self.applied_adaround,
            self.applied_amp,
        )


# --------------------------------- main ---------------------------------------
if __name__ == "__main__":
    key = jax.random.PRNGKey(0)
    k_param, k_x = jax.random.split(key)

    model = ModelPallas(k_param)
    x = jax.random.normal(k_x, (2, 3, 16, 16), jnp.float32)  # NCHW like PyTorch

    out, bnf, cle, ada, amp = model(x)
    jax.block_until_ready(out)

    # Sanity check against a plain-JAX conv reference.
    ref = lax.conv_general_dilated(
        x, model.weight, window_strides=(1, 1), padding="SAME",
        dimension_numbers=("NCHW", "OIHW", "NCHW"),
    ) + model.bias.reshape(1, -1, 1, 1)
    ref = jnp.maximum(ref, 0.0)
    assert out.shape == (2, 3, 16, 16)
    assert jnp.allclose(out, ref, atol=1e-4, rtol=1e-4)
    assert not bool(bnf) and not bool(cle) and not bool(ada) and not bool(amp)

    print("KERNEL_OK")
</pallas_src>

<mosaic_0001>
module attributes {stable_mosaic.version = 11 : i64} {
  func.func @_conv_mm_relu_kernel(%arg0: i32, %arg1: memref<3x28xf32, #tpu.memory_space<vmem>>, %arg2: memref<28x256xf32, #tpu.memory_space<vmem>>, %arg3: memref<3x256xf32, #tpu.memory_space<vmem>>) attributes {dimension_semantics = [#tpu.dimension_semantics<parallel>], iteration_bounds = array<i64: 2>, scalar_prefetch = 0 : i64, scratch_operands = 0 : i64, tpu.core_type = #tpu.core_type<tc>, window_params = [{pipeline_mode = #tpu.pipeline_mode<synchronous>, transform_indices = @transform_0, window_bounds = array<i64: 3, 28>}, {transform_indices = @transform_1, window_bounds = array<i64: 28, 256>}, {transform_indices = @transform_2, window_bounds = array<i64: 3, 256>}]} {
    %c0 = arith.constant 0 : index
    %c0_0 = arith.constant 0 : index
    %0 = vector.load %arg1[%c0, %c0_0] : memref<3x28xf32, #tpu.memory_space<vmem>>, vector<3x28xf32>
    %c0_1 = arith.constant 0 : index
    %c0_2 = arith.constant 0 : index
    %1 = vector.load %arg2[%c0_1, %c0_2] : memref<28x256xf32, #tpu.memory_space<vmem>>, vector<28x256xf32>
    %cst = arith.constant dense<0.000000e+00> : vector<3x256xf32>
    %2 = tpu.matmul %0, %1, %cst {dimension_numbers = #tpu.dot_dimension_numbers<[1], [0], [0], [1], [0, 0, 1, 1], [], []>} : vector<3x28xf32>, vector<28x256xf32>, vector<3x256xf32> -> vector<3x256xf32>
    %cst_3 = arith.constant 0.000000e+00 : f32
    %3 = vector.broadcast %cst_3 : f32 to vector<3x256xf32>
    %4 = arith.maximumf %2, %3 : vector<3x256xf32>
    %c0_4 = arith.constant 0 : index
    %c0_5 = arith.constant 0 : index
    %5 = vector.load %arg3[%c0_4, %c0_5] : memref<3x256xf32, #tpu.memory_space<vmem>>, vector<3x256xf32>
    tpu.vector_store %arg3[%c0_4, %c0_5], %4 {strides = array<i32>} : memref<3x256xf32, #tpu.memory_space<vmem>>, vector<3x256xf32>,
    return
  }
  func.func @transform_0(%arg0: i32) -> (i32, i32) {
    %c0_i32 = arith.constant 0 : i32
    %c0_i32_0 = arith.constant 0 : i32
    %c0_i32_1 = arith.constant 0 : i32
    return %c0_i32, %c0_i32_0 : i32, i32
  }
  func.func @transform_1(%arg0: i32) -> (i32, i32) {
    %c0_i32 = arith.constant 0 : i32
    %c0_i32_0 = arith.constant 0 : i32
    return %c0_i32, %arg0 : i32, i32
  }
  func.func @transform_2(%arg0: i32) -> (i32, i32) {
    %c0_i32 = arith.constant 0 : i32
    %c0_i32_0 = arith.constant 0 : i32
    return %c0_i32, %arg0 : i32, i32
  }
}

</mosaic_0001>

<llo_original>
// kernel: tpu_custom_call.1
$region0: #{tpu_custom_call.1}
  #allocation0 [shape = 'u32[]', space=smem, size = 0x4, offset = 0x4, fixed_abs, tag = 'smem constant byte address 0x4 - core index']
  #allocation1 [shape = 'u32[144,128]{1,0:T(1,128)}', space=vmem, size = 0x12000, scoped, tag = 'internal scratch']
  %s0 = inlined_call_operand.hbm [shape: f32[3,28], index: 0, kind: input, shape index: {}]
  %s1 = inlined_call_operand.hbm [shape: f32[28,512], index: 1, kind: input, shape index: {}]
  %s2 = inlined_call_operand.hbm [shape: f32[3,512], index: 2, kind: output, shape index: {}]
  %s3 = sld [smem:[#allocation0]]
  $region49: #{tpu_custom_call.1} parent=0
    _
  %s5 = ssub.s32 1, %s3
  %s6 = scalar_select 0, %s5, %s3
  $region1: #{tpu_custom_call.1} parent=0
    #allocation2 [shape = 'u8[2048]{0}', space=vmem, size = 0x800, scoped, tag = 'input window, operand 0, single buffered']
    #allocation3 [shape = 's32[2]{0}', space=sflag, size = 0x8, scoped, tag = 'scoped memory for tpu_custom_call.1']
    #allocation4 [shape = 's32[2]{0}', space=sflag, size = 0x8, scoped, tag = 'scoped memory for tpu_custom_call.1']
    #allocation5 [shape = 'u8[65536]{0}', space=vmem, size = 0x10000, scoped, tag = 'input window, operand 1']
    #allocation6 [shape = 's32[2]{0}', space=sflag, size = 0x8, scoped, tag = 'scoped memory for tpu_custom_call.1']
    #allocation7 [shape = 'u8[8192]{0}', space=vmem, size = 0x2000, scoped, tag = 'output window, operand 0']
    %7 = vsyncpa [#allocation3], 0
    %8 = vsyncpa [#allocation6], 0
    %s9 = scalar_lea.sflag [#allocation6], 1
    %10 = vsyncpa %s9, 0
    %11 = vsyncpa [#allocation4], 0
    %s12 = scalar_lea.sflag [#allocation4], 1
    %13 = vsyncpa %s12, 0
    loop: start=0, step=1, limit=4
    $region2: #{tpu_custom_call.1} parent=1 // loop_pre_header
      _
    $region3: #{tpu_custom_call.1} parent=1 // loop_header
      %s15 = sphi 0, %s19
      %p16 = scmp.ge.s32.totalorder %s15, 4
      %s23 = sphi 0, %s23
      %s25 = sphi 0, %s23
      %s26 = sphi 0, %s25
      %s40 = sphi 0, %s26
      %s46 = sphi 0, %s48
      %s49 = sphi 0, %s46
      %s50 = sphi 0, %s49
      %s66 = sphi 0, %s50
      %s72 = sphi 0, %s74
      %s75 = sphi 0, %s72
      %s76 = sphi 0, %s75
      %s92 = sphi 0, %s76
    $region4: #{tpu_custom_call.1} parent=1 // loop_header_branch
      %18 = sbr.rel (%p16) target = $region8
    $region5: #{tpu_custom_call.1} parent=1 // loop_body
      %s20 = ssub.s32 %s15, 1
      %s21 = ssub.s32 %s15, 2
      %s22 = sadd.s32 %s15, 1
      %s24 = sadd.s32 %s23, 1
      %p27 = scmp.eq.s32.totalorder %s15, 1
      %p28 = scmp.ne.s32.totalorder %s23, %s25
      %p29 = scmp.eq.s32.totalorder %s15, 0
      %p30 = por %p28, %p29
      %p31 = scmp.ne.s32.totalorder %s23, %s25
      %p32 = scmp.eq.s32.totalorder %s20, 1
      %p33 = por %p31, %p32
      %p34 = scmp.ne.s32.totalorder %s25, %s26
      %p35 = scmp.eq.s32.totalorder %s20, 0
      %p36 = por %p34, %p35
      %p37 = scmp.ne.s32.totalorder %s25, %s26
      %p38 = scmp.eq.s32.totalorder %s21, 1
      %p39 = por %p37, %p38
      %p41 = scmp.ne.s32.totalorder %s26, %s40
      %p42 = scmp.eq.s32.totalorder %s21, 0
      %p43 = por %p41, %p42
      %s44 = ssub.s32 %s15, %s22
      %p45 = scmp.eq.s32.totalorder %s44, 0
      %s47 = sadd.s32 %s46, 1
      %s48 = scalar_select %p45, %s46, %s47
      %p51 = pneg %p45
      %p52 = scmp.eq.s32.totalorder %s15, 1
      %p53 = por %p51, %p52
      %p54 = scmp.ne.s32.totalorder %s46, %s49
      %p55 = scmp.eq.s32.totalorder %s15, 0
      %p56 = por %p54, %p55
      %p57 = scmp.ne.s32.totalorder %s46, %s49
      %p58 = scmp.eq.s32.totalorder %s20, 1
      %p59 = por %p57, %p58
      %p60 = scmp.ne.s32.totalorder %s49, %s50
      %p61 = scmp.eq.s32.totalorder %s20, 0
      %p62 = por %p60, %p61
      %p63 = scmp.ne.s32.totalorder %s49, %s50
      %p64 = scmp.eq.s32.totalorder %s21, 1
      %p65 = por %p63, %p64
      %p67 = scmp.ne.s32.totalorder %s50, %s66
      %p68 = scmp.eq.s32.totalorder %s21, 0
      %p69 = por %p67, %p68
      %s70 = ssub.s32 %s15, %s22
      %p71 = scmp.eq.s32.totalorder %s70, 0
      %s73 = sadd.s32 %s72, 1
      %s74 = scalar_select %p71, %s72, %s73
      %p77 = pneg %p71
      %p78 = scmp.eq.s32.totalorder %s15, 1
      %p79 = por %p77, %p78
      %p80 = scmp.ne.s32.totalorder %s72, %s75
      %p81 = scmp.eq.s32.totalorder %s15, 0
      %p82 = por %p80, %p81
      %p83 = scmp.ne.s32.totalorder %s72, %s75
      %p84 = scmp.eq.s32.totalorder %s20, 1
      %p85 = por %p83, %p84
      %p86 = scmp.ne.s32.totalorder %s75, %s76
      %p87 = scmp.eq.s32.totalorder %s20, 0
      %p88 = por %p86, %p87
      %p89 = scmp.ne.s32.totalorder %s75, %s76
      %p90 = scmp.eq.s32.totalorder %s21, 1
      %p91 = por %p89, %p90
      %p93 = scmp.ne.s32.totalorder %s76, %s92
      %p94 = scmp.eq.s32.totalorder %s21, 0
      %p95 = por %p93, %p94
      %p96 = scmp.le.s32.totalorder 1, %s15
      %p97 = scmp.lt.s32.totalorder %s15, 3
      %p98 = pnand %p96, %p97
      %p99 = pneg %p98
      // Predicated region
      $region9: #{tpu_custom_call.1} parent=5 // pred_check
        _
      $region10: #{tpu_custom_call.1} parent=5 // pred_check_branch
        %101 = sbr.rel (%p98) target = $region12
      $region11: #{tpu_custom_call.1} parent=5 // pred_region
        %s102 = ssub.s32 %s15, 1
        // Predicated region
        $region13: #{tpu_custom_call.1} parent=11 // pred_check
          %p103 = pneg %p36
        $region14: #{tpu_custom_call.1} parent=11 // pred_check_branch
          %105 = sbr.rel (%p103) target = $region16
        $region15: #{tpu_custom_call.1} parent=11 // pred_region
          %s107 = ssub.s32 64, 64
          %108 = vsyncadd [#allocation3], %s107
          %s110 = sshll.u32 [#allocation2], 4
          %s111 = int_to_ptr.vmem [resolvable:$true] %s110
          %113 = dma.hbm_to_vmem [thread:$0]  %s0, 64, %s111, [#allocation3]
        $region16: #{tpu_custom_call.1} parent=11 // pred_fallthru
          _
      $region12: #{tpu_custom_call.1} parent=5 // pred_fallthru
        _
      %p114 = scmp.lt.s32.totalorder %s15, 2
      // Predicated region
      $region17: #{tpu_custom_call.1} parent=5 // pred_check
        %p115 = pneg %p114
      $region18: #{tpu_custom_call.1} parent=5 // pred_check_branch
        %117 = sbr.rel (%p115) target = $region20
      $region19: #{tpu_custom_call.1} parent=5 // pred_region
        // Predicated region
        $region21: #{tpu_custom_call.1} parent=19 // pred_check
          %p118 = pneg %p56
        $region22: #{tpu_custom_call.1} parent=19 // pred_check_branch
          %120 = sbr.rel (%p118) target = $region24
        $region23: #{tpu_custom_call.1} parent=19 // pred_region
          %s121 = sand.u32 %s46, 1
          %s122 = scalar_lea.sflag [#allocation6], %s121
          %s123 = sand.u32 %s46, 1
          %s124 = smul.addr %s123, 64
          %s125 = scalar_lea.vmem [#allocation5], %s124
          %s126 = smul.u32 2, %s15
          %s128 = ssub.s32 1024, 1024
          %129 = vsyncadd %s122, %s128
          %s130 = smul.addr %s126, 128
          %s131 = scalar_lea.hbm %s1, %s130
          %s132 = sshll.u32 %s125, 4
          %s133 = int_to_ptr.vmem [resolvable:$true] %s132
          %138 = dma.hbm_to_vmem [thread:$0]  %s131, 1024, %s133, %s122, 512, 256, 16
        $region24: #{tpu_custom_call.1} parent=19 // pred_fallthru
          _
      $region20: #{tpu_custom_call.1} parent=5 // pred_fallthru
        _
      %p139 = scmp.le.s32.totalorder 1, %s15
      %p140 = scmp.lt.s32.totalorder %s15, 3
      %p141 = pnand %p139, %p140
      %p142 = pneg %p141
      // Predicated region
      $region25: #{tpu_custom_call.1} parent=5 // pred_check
        _
      $region26: #{tpu_custom_call.1} parent=5 // pred_check_branch
        %144 = sbr.rel (%p141) target = $region28
      $region27: #{tpu_custom_call.1} parent=5 // pred_region
        %s145 = ssub.s32 %s15, 1
        // Predicated region
        $region29: #{tpu_custom_call.1} parent=27 // pred_check
          %p146 = pneg %p36
        $region30: #{tpu_custom_call.1} parent=27 // pred_check_branch
          %148 = sbr.rel (%p146) target = $region32
        $region31: #{tpu_custom_call.1} parent=27 // pred_region
          %149 = dma.done [#allocation3], 64
        $region32: #{tpu_custom_call.1} parent=27 // pred_fallthru
          _
        %s150 = sand.u32 %s49, 1
        %s151 = scalar_lea.sflag [#allocation6], %s150
        %s152 = sand.u32 %s49, 1
        %s153 = smul.addr %s152, 64
        %s154 = scalar_lea.vmem [#allocation5], %s153
        // Predicated region
        $region33: #{tpu_custom_call.1} parent=27 // pred_check
          %p155 = pneg %p62
        $region34: #{tpu_custom_call.1} parent=27 // pred_check_branch
          %157 = sbr.rel (%p155) target = $region36
        $region35: #{tpu_custom_call.1} parent=27 // pred_region
          %158 = dma.done %s151, 1024
        $region36: #{tpu_custom_call.1} parent=27 // pred_fallthru
          _
        %p159 = pneg %p36
        %p160 = pneg %p33
        %s161 = sand.u32 %s49, 1
        %s162 = scalar_lea.sflag [#allocation6], %s161
        %s163 = sand.u32 %s49, 1
        %s164 = smul.addr %s163, 64
        %s165 = scalar_lea.vmem [#allocation5], %s164
        %p166 = pneg %p62
        %p167 = pneg %p59
        %p168 = pneg %p88
        %p169 = pneg %p85
        %s170 = sand.u32 %s75, 1
        %s171 = scalar_lea.sflag [#allocation4], %s170
        %s172 = sand.u32 %s75, 1
        %s173 = smul.addr %s172, 8
        %s174 = scalar_lea.vmem [#allocation7], %s173
        %s175 = smul.u32 2, %s20
        %s176 = smul.u32 2, %s20
        %v177 = vld [vmem:[#allocation2] sm:$0x7]
        %v178 = vld [vmem:[%s154] sm:$0xff]
        %v179 = vld [vmem:[%s154 + $0x8] sm:$0xff]
        %v180 = vld [vmem:[%s154 + $0x10] sm:$0xff]
        %v181 = vld [vmem:[%s154 + $0x18] sm:$0xff]
        %v182 = vld [vmem:[%s154 + $0x20] sm:$0xff]
        %v183 = vld [vmem:[%s154 + $0x28] sm:$0xff]
        %v184 = vld [vmem:[%s154 + $0x30] sm:$0xf]
        %v185 = vld [vmem:[%s154 + $0x38] sm:$0xf]
        %vm186 = vcmask 228352
        %v188 = vsel %vm186, %v177, 0
        %vm190 = vcmask 1043456
        %v192 = vsel %vm190, %v184, 0
        %v195 = vsel %vm190, %v185, 0
        %197 = vmatprep.subr.mxu0 0.0
        %198 = vmatpush1.msra.mxu0 0.0
        %199 = vmatprep.subr.mxu0 0.0
        %200 = vmatpush1.msra.mxu0 0.0
        %201 = vmatprep.subr.mxu0 0.0
        %202 = vmatpush1.msra.mxu0 0.0
        %203 = vmatprep.subr.mxu0 0.0
        %204 = vmatpush1.msra.mxu0 0.0
        %205 = vmatprep.subr.mxu0 0.0
        %206 = vmatpush1.msra.mxu0 0.0
        %207 = vmatprep.subr.mxu0 0.0
        %208 = vmatpush1.msra.mxu0 0.0
        %209 = vmatprep.subr.mxu0 0.0
        %210 = vmatpush1.msra.mxu0 0.0
        %211 = vmatprep.subr.mxu0 0.0
        %212 = vmatpush1.msra.mxu0 0.0
        %213 = vmatprep.subr.mxu0 0.0
        %214 = vmatpush1.msra.mxu0 0.0
        %215 = vmatprep.subr.mxu0 0.0
        %216 = vmatpush1.msra.mxu0 0.0
        %217 = vmatprep.subr.mxu0 0.0
        %218 = vmatpush1.msra.mxu0 0.0
        %219 = vmatprep.subr.mxu0 0.0
        %220 = vmatpush1.msra.mxu0 0.0
        %221 = vmatprep.subr.mxu0 %v195
        %222 = vmatpush1.msra.mxu0 %v192
        %223 = vmatprep.subr.mxu0 %v183
        %224 = vmatpush1.msra.mxu0 %v182
        %225 = vmatprep.subr.mxu0 %v181
        %226 = vmatpush1.msra.mxu0 %v180
        %227 = vmatprep.subr.mxu0 %v179
        %228 = vmatpush1.msra.mxu0 %v178
        %229 = vmatprep.subr.mxu0 0.0
        %230 = vmatpush2.msra.mxu0 0.0
        %231 = vmatprep.subr.mxu0 0.0
        %232 = vmatpush2.msra.mxu0 0.0
        %233 = vmatprep.subr.mxu0 0.0
        %234 = vmatpush2.msra.mxu0 0.0
        %235 = vmatprep.subr.mxu0 0.0
        %236 = vmatpush2.msra.mxu0 0.0
        %237 = vmatprep.subr.mxu0 0.0
        %238 = vmatpush2.msra.mxu0 0.0
        %239 = vmatprep.subr.mxu0 0.0
        %240 = vmatpush2.msra.mxu0 0.0
        %241 = vmatprep.subr.mxu0 0.0
        %242 = vmatpush2.msra.mxu0 0.0
        %243 = vmatprep.subr.mxu0 0.0
        %244 = vmatpush2.msra.mxu0 0.0
        %245 = vmatprep.subr.mxu0 0.0
        %246 = vmatpush2.msra.mxu0 0.0
        %247 = vmatprep.subr.mxu0 0.0
        %248 = vmatpush2.msra.mxu0 0.0
        %249 = vmatprep.subr.mxu0 0.0
        %250 = vmatpush2.msra.mxu0 0.0
        %251 = vmatprep.subr.mxu0 0.0
        %252 = vmatpush2.msra.mxu0 0.0
        %253 = vmatprep.subr.mxu0 0.0
        %254 = vmatpush2.msra.mxu0 0.0
        %255 = vmatprep.subr.mxu0 0.0
        %256 = vmatpush2.msra.mxu0 0.0
        %257 = vmatprep.subr.mxu0 0.0
        %258 = vmatpush2.msra.mxu0 0.0
        %259 = vmatprep.subr.mxu0 0.0
        %260 = vmatpush2.msra.mxu0 0.0
        %261 = vmatprep.mubr.f32.mxu0 0.0
        %262 = vmatmul.mubr.f32.gmra.mxu0 %v188
        %v263 = vpop.f32.mrf.mxu0
        %v264 = vadd.f32 0.0, %v263
        %v265 = vpop.f32.mrf.mxu0
        %v266 = vadd.f32 0.0, %v265
        %267 = vdwg.mxu0
        %v268 = vmax.f32 %v264, 0.0
        %v269 = vmax.f32 %v266, 0.0
        %v272 = vcombine.low %v268, %v269
        %274 = vst [vmem:[%s174] sm:$0x77] %v272
        %s275 = sand.u32 %s75, 1
        %s276 = scalar_lea.sflag [#allocation4], %s275
        %s277 = sand.u32 %s75, 1
        %s278 = smul.addr %s277, 8
        %s279 = scalar_lea.vmem [#allocation7], %s278
        // Predicated region
        $region37: #{tpu_custom_call.1} parent=27 // pred_check
          %p280 = pneg %p85
        $region38: #{tpu_custom_call.1} parent=27 // pred_check_branch
          %282 = sbr.rel (%p280) target = $region40
        $region39: #{tpu_custom_call.1} parent=27 // pred_region
          %s283 = smul.u32 2, %s20
          %s285 = ssub.s32 128, 128
          %286 = vsyncadd %s276, %s285
          %s287 = smul.addr %s283, 64
          %s288 = scalar_lea.hbm %s2, %s287
          %s290 = sshll.u32 %s279, 4
          %s291 = int_to_ptr.vmem [resolvable:$true] %s290
          %293 = dma.vmem_to_hbm [thread:$0]  %s291, 128, %s288, %s276
        $region40: #{tpu_custom_call.1} parent=27 // pred_fallthru
          _
      $region28: #{tpu_custom_call.1} parent=5 // pred_fallthru
        _
      %p294 = scmp.le.s32.totalorder 2, %s15
      // Predicated region
      $region41: #{tpu_custom_call.1} parent=5 // pred_check
        %p295 = pneg %p294
      $region42: #{tpu_custom_call.1} parent=5 // pred_check_branch
        %297 = sbr.rel (%p295) target = $region44
      $region43: #{tpu_custom_call.1} parent=5 // pred_region
        %s298 = ssub.s32 %s15, 2
        // Predicated region
        $region45: #{tpu_custom_call.1} parent=43 // pred_check
          %p299 = pneg %p91
        $region46: #{tpu_custom_call.1} parent=43 // pred_check_branch
          %301 = sbr.rel (%p299) target = $region48
        $region47: #{tpu_custom_call.1} parent=43 // pred_region
          %s302 = sand.u32 %s76, 1
          %s303 = scalar_lea.sflag [#allocation4], %s302
          %s304 = sand.u32 %s76, 1
          %s305 = smul.addr %s304, 8
          %s306 = scalar_lea.vmem [#allocation7], %s305
          %307 = dma.done %s303, 128
        $region48: #{tpu_custom_call.1} parent=43 // pred_fallthru
          _
      $region44: #{tpu_custom_call.1} parent=5 // pred_fallthru
        _
    $region6: #{tpu_custom_call.1} parent=1 // loop_footer
      %s19 = sadd.s32 1, %s15
    $region7: #{tpu_custom_call.1} parent=1 // loop_footer_branch
      %14 = sbr.rel target = $region3
    $region8: #{tpu_custom_call.1} parent=1 // loop_exit
      _
    %308 = vsyncpa [#allocation3], 1
    %s309 = scalar_lea.sflag [#allocation3], 1
    %310 = vsyncpa %s309, 1
    %311 = vsyncpa [#allocation6], 1
    %s312 = scalar_lea.sflag [#allocation6], 1
    %313 = vsyncpa %s312, 1
    %314 = vsyncpa [#allocation4], 1
    %s315 = scalar_lea.sflag [#allocation4], 1
    %316 = vsyncpa %s315, 1

</llo_original>
